<compile_context>
chip_gen: v7x
topology: tpu7x:2x2x1
jax: 0.10.0
libtpu: 0.0.40
codegen_flags: <defaults>
</compile_context>

<pallas_src>
import functools
import math

import jax
import jax.numpy as jnp
from jax.experimental import pallas as pl
from jax.experimental.pallas import tpu as pltpu

# matches the PhaseMod comment: "8 revolutions 1025*dt = 0.34 secs"
PLOT_DT = 0.34 / 1025.0
_NEG_LN10_OVER_10 = -math.log(10.0) / 10.0


# ----------------------------------------------------------------------------- kernel
def _phase_kernel(scalars_ref, amp_ref, basis_ref, noise_ref, out_ref):
    # scalars_ref: SMEM int32[1] = [snr_db]
    # amp_ref    : VMEM f32[R, BS]
    # basis_ref  : VMEM f32[BS, L]
    # noise_ref  : VMEM f32[R, L]   (standard-normal draws; zeros if noise disabled)
    # out_ref    : VMEM f32[2R, L]  (rows 0..R-1 phases, rows R..2R-1 injected)

    # basis2curve as one tiny MXU matmul: (R, BS) @ (BS, L) -> (R, L)
    x = jnp.dot(amp_ref[...], basis_ref[...], preferred_element_type=jnp.float32)

    # snr_db_to_variance(snr_db, ||x||_2): var = ||x|| * 10^(-snr/10)
    snr = scalars_ref[0].astype(jnp.float32)
    scale = jnp.exp(snr * jnp.float32(_NEG_LN10_OVER_10))            # 10^(-snr/10)
    sig_norm = jnp.sqrt(jnp.sum(x * x, axis=-1, keepdims=True))      # (R, 1)
    injected = x + noise_ref[...] * (sig_norm * scale)

    # Single sublane/lane-dense store of the fused (2R, L) output slab
    # (avoids two masked partial-row stores).
    out_ref[...] = jnp.concatenate([x, injected], axis=0)


def phase_forward(amplitudes, basis, noise, snr_db_i32):
    """amplitudes: (R, BS) f32, basis: (BS, L) f32, noise: (R, L) f32,
    snr_db_i32: (1,) int32.  Returns (phases, injected_phases), each (R, L) f32."""
    R, BS = amplitudes.shape
    BS2, L = basis.shape
    assert BS == BS2 and noise.shape == (R, L)

    grid_spec = pltpu.PrefetchScalarGridSpec(
        num_scalar_prefetch=1,                 # [snr_db] lands in SMEM
        grid=(1,),
        in_specs=[
            pl.BlockSpec((R, BS), lambda i, s: (0, 0)),    # amplitudes (full extent)
            pl.BlockSpec((BS, L), lambda i, s: (0, 0)),    # shared basis (full extent)
            pl.BlockSpec((R, L), lambda i, s: (0, 0)),     # noise (full extent)
        ],
        out_specs=pl.BlockSpec((2 * R, L), lambda i, s: (0, 0)),   # fused output slab
    )
    out = pl.pallas_call(
        _phase_kernel,
        out_shape=jax.ShapeDtypeStruct((2 * R, L), jnp.float32),
        grid_spec=grid_spec,
        compiler_params=pltpu.CompilerParams(
            dimension_semantics=("arbitrary",),
            vmem_limit_bytes=2 * 1024 * 1024,   # total footprint is < 100 KB
        ),
    )(snr_db_i32, amplitudes, basis, noise)
    return out[:R], out[R:]


# ----------------------------------------------------------------------------- modules
class PhaseModPallas:
    """JAX port of PhaseMod (use_fourier=True, interp_gap=1)."""

    def __init__(self, rec_len, n_rotors, basis_size, cutoff,
                 initialization="sine", init_size=1.0, use_cosine=False):
        self.recording_length = 2 ** math.floor(math.log2(rec_len)) + 1
        self.n_rotors = n_rotors
        self.basis_size = basis_size
        L = self.recording_length
        dt = PLOT_DT
        period_time = L * dt

        tau = jnp.arange(1, basis_size + 1, dtype=jnp.float32).reshape(basis_size, 1)
        phi_dot_freqs_raw = jnp.arange(L, dtype=jnp.float32) * dt * tau        # (BS, L)
        phi_dot_freqs = phi_dot_freqs_raw * (2.0 * jnp.pi * cutoff / period_time)
        fn = jnp.cos if use_cosine else jnp.sin
        # The PyTorch code repeats this basis across rotors; it is identical per rotor,
        # so keep a single (BS, L) copy and let the kernel matmul against it.
        # PyTorch keeps the basis in float64; TPU kernel uses float32.
        self.basis = (fn(phi_dot_freqs) / tau).astype(jnp.float32)             # (BS, L)

        # Amplitudes stored as (R, BS) — the MXU LHS (reference keeps (R, BS, 1)).
        amps = jnp.zeros((n_rotors, basis_size), jnp.float32)
        if initialization == "sine":
            amps = amps.at[:, 0].set(init_size)
        elif initialization == "max_freq_const":
            amps = amps.at[:, -1].set(init_size)
        elif initialization == "grad_freq_sine":
            for i in range(min(n_rotors, 4)):
                amps = amps.at[i, i].set(init_size)
        # TODO(synk): 'antiphase_sines' / 'antiphase_time_domain' fourier inits omitted.
        self.amplitudes = amps
        # TODO(synk): interp_gap > 1 cubic-Hermite resampling (searchsorted based) not ported.


class LocalizationModelPallas:
    """JAX/Pallas port of the computable part of Localization_Model.forward()."""

    def __init__(self, rec_len=256, n_rotors=4, basis_size=8, cutoff=8.0,
                 initialization="sine", init_size=1.0, inject_noise=True,
                 phase_modulation_snr_db_list=(25, 30, 35)):
        self.phase_model = PhaseModPallas(rec_len, n_rotors, basis_size, cutoff,
                                          initialization=initialization,
                                          init_size=init_size)
        self.inject_noise = inject_noise
        self.snr_list = jnp.asarray(phase_modulation_snr_db_list, jnp.int32)
        self.omega_per_rotor = 2.0 * jnp.pi * 23.46668440418565
        self.dt = PLOT_DT

    def forward(self, audio_input, key):
        pm = self.phase_model
        R, L = pm.n_rotors, pm.recording_length

        if self.inject_noise:
            k_choice, k_noise = jax.random.split(key)
            snr_db = jax.random.choice(k_choice, self.snr_list).astype(jnp.int32)
            noise = jax.random.normal(k_noise, (R, L), jnp.float32)
        else:
            # snr_db = 0 and zero noise make injected == phases exactly in-kernel.
            snr_db = jnp.zeros((), jnp.int32)
            noise = jnp.zeros((R, L), jnp.float32)
        scalars = jnp.reshape(snr_db, (1,))                       # (1,) int32

        phases, injected_phases = phase_forward(pm.amplitudes, pm.basis, noise, scalars)

        # audio_input would be consumed by apply_modulation(...) below.
        del audio_input
        # TODO(synk): apply_modulation, preprocess_audio_waveform (STFT) and the
        #             SpectrogramTransformer backward model are undefined in the source.
        return phases, injected_phases


# ----------------------------------------------------------------------------- main
if __name__ == "__main__":
    key = jax.random.PRNGKey(0)
    k_in, k_fwd = jax.random.split(key)

    model = LocalizationModelPallas(rec_len=256, n_rotors=4, basis_size=8,
                                    cutoff=8.0, inject_noise=True)
    L = model.phase_model.recording_length                     # 257
    R = model.phase_model.n_rotors                              # 4
    # microphone recordings (batch=2, num_microphones=4, recording_length)
    x = jax.random.normal(k_in, (2, 4, L), jnp.float32)

    phases, injected = model.forward(x, k_fwd)
    jax.block_until_ready((phases, injected))

    # sanity checks against the plain-JAX reference of the same math
    ref_phases = model.phase_model.amplitudes @ model.phase_model.basis   # (R, L)
    assert phases.shape == (R, L) and injected.shape == (R, L)
    assert jnp.allclose(phases, ref_phases, atol=1e-5)
    assert bool(jnp.all(jnp.isfinite(injected)))

    print("KERNEL_OK")
</pallas_src>

<mosaic_0001>
module attributes {stable_mosaic.version = 11 : i64} {
  func.func @_phase_kernel(%arg0: i32, %arg1: memref<1xi32, #tpu.memory_space<smem>>, %arg2: memref<4x8xf32, #tpu.memory_space<vmem>>, %arg3: memref<8x257xf32, #tpu.memory_space<vmem>>, %arg4: memref<4x257xf32, #tpu.memory_space<vmem>>, %arg5: memref<8x257xf32, #tpu.memory_space<vmem>>) attributes {dimension_semantics = [#tpu.dimension_semantics<arbitrary>], iteration_bounds = array<i64: 1>, scalar_prefetch = 1 : i64, scratch_operands = 0 : i64, tpu.core_type = #tpu.core_type<tc>, window_params = [{pipeline_mode = #tpu.pipeline_mode<synchronous>, transform_indices = @transform_0, window_bounds = array<i64: 4, 8>}, {pipeline_mode = #tpu.pipeline_mode<synchronous>, transform_indices = @transform_1, window_bounds = array<i64: 8, 257>}, {pipeline_mode = #tpu.pipeline_mode<synchronous>, transform_indices = @transform_2, window_bounds = array<i64: 4, 257>}, {pipeline_mode = #tpu.pipeline_mode<synchronous>, transform_indices = @transform_3, window_bounds = array<i64: 8, 257>}]} {
    %c0 = arith.constant 0 : index
    %c0_0 = arith.constant 0 : index
    %0 = vector.load %arg2[%c0, %c0_0] : memref<4x8xf32, #tpu.memory_space<vmem>>, vector<4x8xf32>
    %c0_1 = arith.constant 0 : index
    %c0_2 = arith.constant 0 : index
    %1 = vector.load %arg3[%c0_1, %c0_2] : memref<8x257xf32, #tpu.memory_space<vmem>>, vector<8x257xf32>
    %cst = arith.constant dense<0.000000e+00> : vector<4x257xf32>
    %2 = tpu.matmul %0, %1, %cst {dimension_numbers = #tpu.dot_dimension_numbers<[1], [0], [0], [1], [0, 0, 1, 1], [], []>} : vector<4x8xf32>, vector<8x257xf32>, vector<4x257xf32> -> vector<4x257xf32>
    %c0_3 = arith.constant 0 : index
    %3 = memref.load %arg1[%c0_3] : memref<1xi32, #tpu.memory_space<smem>>
    %4 = arith.sitofp %3 : i32 to f32
    %cst_4 = arith.constant -0.23025851 : f32
    %5 = arith.mulf %4, %cst_4 : f32
    %6 = math.exp %5 : f32
    %7 = arith.mulf %2, %2 : vector<4x257xf32>
    %cst_5 = arith.constant dense<0.000000e+00> : vector<4xf32>
    %8 = vector.multi_reduction <add>, %7, %cst_5 [1] : vector<4x257xf32> to vector<4xf32>
    %9 = vector.shape_cast %8 : vector<4xf32> to vector<4x1xf32>
    %10 = math.sqrt %9 : vector<4x1xf32>
    %c0_6 = arith.constant 0 : index
    %c0_7 = arith.constant 0 : index
    %11 = vector.load %arg4[%c0_6, %c0_7] : memref<4x257xf32, #tpu.memory_space<vmem>>, vector<4x257xf32>
    %12 = vector.broadcast %6 : f32 to vector<4x1xf32>
    %13 = arith.mulf %10, %12 : vector<4x1xf32>
    %14 = vector.broadcast %13 : vector<4x1xf32> to vector<4x257xf32>
    %15 = arith.mulf %11, %14 : vector<4x257xf32>
    %16 = arith.addf %2, %15 : vector<4x257xf32>
    %17 = tpu.concatenate %2, %16 in 0 : vector<4x257xf32>, vector<4x257xf32> -> vector<8x257xf32>
    %c0_8 = arith.constant 0 : index
    %c0_9 = arith.constant 0 : index
    %18 = vector.load %arg5[%c0_8, %c0_9] : memref<8x257xf32, #tpu.memory_space<vmem>>, vector<8x257xf32>
    tpu.vector_store %arg5[%c0_8, %c0_9], %17 {strides = array<i32>} : memref<8x257xf32, #tpu.memory_space<vmem>>, vector<8x257xf32>,
    return
  }
  func.func @transform_0(%arg0: i32, %arg1: memref<1xi32, #tpu.memory_space<smem>>) -> (i32, i32) {
    %c0_i32 = arith.constant 0 : i32
    %c0_i32_0 = arith.constant 0 : i32
    %c0_i32_1 = arith.constant 0 : i32
    return %c0_i32, %c0_i32_0 : i32, i32
  }
  func.func @transform_1(%arg0: i32, %arg1: memref<1xi32, #tpu.memory_space<smem>>) -> (i32, i32) {
    %c0_i32 = arith.constant 0 : i32
    %c0_i32_0 = arith.constant 0 : i32
    %c0_i32_1 = arith.constant 0 : i32
    return %c0_i32, %c0_i32_0 : i32, i32
  }
  func.func @transform_2(%arg0: i32, %arg1: memref<1xi32, #tpu.memory_space<smem>>) -> (i32, i32) {
    %c0_i32 = arith.constant 0 : i32
    %c0_i32_0 = arith.constant 0 : i32
    %c0_i32_1 = arith.constant 0 : i32
    return %c0_i32, %c0_i32_0 : i32, i32
  }
  func.func @transform_3(%arg0: i32, %arg1: memref<1xi32, #tpu.memory_space<smem>>) -> (i32, i32) {
    %c0_i32 = arith.constant 0 : i32
    %c0_i32_0 = arith.constant 0 : i32
    %c0_i32_1 = arith.constant 0 : i32
    return %c0_i32, %c0_i32_0 : i32, i32
  }
}

</mosaic_0001>

<llo_original>
// kernel: tpu_custom_call.1
$region0: #{tpu_custom_call.1}
  #allocation0 [shape = 'u32[]', space=smem, size = 0x4, offset = 0x4, fixed_abs, tag = 'smem constant byte address 0x4 - core index']
  #allocation1 [shape = 'u32[144,128]{1,0:T(1,128)}', space=vmem, size = 0x12000, scoped, tag = 'internal scratch']
  #allocation2 [shape = 's32[1]{0}', space=sflag, size = 0x4, scoped, tag = 'scoped memory for tpu_custom_call.1']
  #allocation3 [shape = 's32[1]{0:T(128)S(6)}', space=smem, size = 0x200, scoped, tag = 'prefetched SMEM operand 0']
  %s0 = inlined_call_operand.<no memory space> [shape: s32[1], index: 0, kind: input, shape index: {}]
  %s1 = inlined_call_operand.hbm [shape: f32[4,8], index: 1, kind: input, shape index: {}]
  %s2 = inlined_call_operand.hbm [shape: f32[8,257], index: 2, kind: input, shape index: {}]
  %s3 = inlined_call_operand.hbm [shape: f32[4,257], index: 3, kind: input, shape index: {}]
  %s4 = inlined_call_operand.hbm [shape: f32[8,257], index: 4, kind: output, shape index: {}]
  %s5 = sld [smem:[#allocation0]]
  $region34: #{tpu_custom_call.1} parent=0
    _
  %s7 = ssub.s32 1, %s5
  %s8 = scalar_select 0, %s7, %s5
  %9 = sst [smem:[#allocation3]] %s0
  $region1: #{tpu_custom_call.1} parent=0
    #allocation4 [shape = 'u8[2048]{0}', space=vmem, size = 0x800, scoped, tag = 'input window, operand 1, single buffered']
    #allocation5 [shape = 's32[1]{0}', space=sflag, size = 0x4, scoped, tag = 'scoped memory for tpu_custom_call.1']
    #allocation6 [shape = 's32[1]{0}', space=sflag, size = 0x4, scoped, tag = 'scoped memory for tpu_custom_call.1']
    #allocation7 [shape = 'u8[12288]{0}', space=vmem, size = 0x3000, scoped, tag = 'input window, operand 2, single buffered']
    #allocation8 [shape = 's32[1]{0}', space=sflag, size = 0x4, scoped, tag = 'scoped memory for tpu_custom_call.1']
    #allocation9 [shape = 'u8[6144]{0}', space=vmem, size = 0x1800, scoped, tag = 'input window, operand 3, single buffered']
    #allocation10 [shape = 'u8[12288]{0}', space=vmem, size = 0x3000, scoped, tag = 'output window, operand 0, single buffered']
    %10 = vsyncpa [#allocation5], 0
    %11 = vsyncpa [#allocation8], 0
    %12 = vsyncpa [#allocation6], 0
    // Predicated region
    $region2: #{tpu_custom_call.1} parent=1 // pred_check
      _
    $region3: #{tpu_custom_call.1} parent=1 // pred_check_branch
      %14 = sbr.rel (0) target = $region5
    $region4: #{tpu_custom_call.1} parent=1 // pred_region
      %s16 = ssub.s32 64, 64
      %17 = vsyncadd [#allocation5], %s16
      %s19 = sshll.u32 [#allocation4], 4
      %s20 = int_to_ptr.vmem [resolvable:$true] %s19
      %22 = dma.hbm_to_vmem [thread:$0]  %s1, 64, %s20, [#allocation5]
    $region5: #{tpu_custom_call.1} parent=1 // pred_fallthru
      _
    // Predicated region
    $region6: #{tpu_custom_call.1} parent=1 // pred_check
      _
    $region7: #{tpu_custom_call.1} parent=1 // pred_check_branch
      %24 = sbr.rel (0) target = $region9
    $region8: #{tpu_custom_call.1} parent=1 // pred_region
      %s26 = ssub.s32 384, 384
      %27 = vsyncadd [#allocation8], %s26
      %s29 = sshll.u32 [#allocation7], 4
      %s30 = int_to_ptr.vmem [resolvable:$true] %s29
      %32 = dma.hbm_to_vmem [thread:$0]  %s2, 384, %s30, [#allocation8]
    $region9: #{tpu_custom_call.1} parent=1 // pred_fallthru
      _
    // Predicated region
    $region10: #{tpu_custom_call.1} parent=1 // pred_check
      _
    $region11: #{tpu_custom_call.1} parent=1 // pred_check_branch
      %34 = sbr.rel (0) target = $region13
    $region12: #{tpu_custom_call.1} parent=1 // pred_region
      %s36 = ssub.s32 192, 192
      %37 = vsyncadd [#allocation8], %s36
      %s39 = sshll.u32 [#allocation9], 4
      %s40 = int_to_ptr.vmem [resolvable:$true] %s39
      %42 = dma.hbm_to_vmem [thread:$0]  %s3, 192, %s40, [#allocation8]
    $region13: #{tpu_custom_call.1} parent=1 // pred_fallthru
      _
    // Predicated region
    $region14: #{tpu_custom_call.1} parent=1 // pred_check
      _
    $region15: #{tpu_custom_call.1} parent=1 // pred_check_branch
      %44 = sbr.rel (0) target = $region17
    $region16: #{tpu_custom_call.1} parent=1 // pred_region
      %45 = dma.done [#allocation5], 64
    $region17: #{tpu_custom_call.1} parent=1 // pred_fallthru
      _
    // Predicated region
    $region18: #{tpu_custom_call.1} parent=1 // pred_check
      _
    $region19: #{tpu_custom_call.1} parent=1 // pred_check_branch
      %47 = sbr.rel (0) target = $region21
    $region20: #{tpu_custom_call.1} parent=1 // pred_region
      %48 = dma.done [#allocation8], 384
    $region21: #{tpu_custom_call.1} parent=1 // pred_fallthru
      _
    // Predicated region
    $region22: #{tpu_custom_call.1} parent=1 // pred_check
      _
    $region23: #{tpu_custom_call.1} parent=1 // pred_check_branch
      %50 = sbr.rel (0) target = $region25
    $region24: #{tpu_custom_call.1} parent=1 // pred_region
      %51 = dma.done [#allocation8], 192
    $region25: #{tpu_custom_call.1} parent=1 // pred_fallthru
      _
    %v52 = vld [vmem:[#allocation4] sm:$0xf]
    %v53 = vld [vmem:[#allocation7] sm:$0xff]
    %v54 = vld [vmem:[#allocation7 + $0x8] sm:$0xff]
    %v55 = vld [vmem:[#allocation7 + $0x10] sm:$0xff]
    %vm56 = vcmask 64512
    %v58 = vsel %vm56, %v52, 0
    %60 = vmatprep.subr.mxu0 %v54
    %61 = vmatpush1.msra.mxu0 %v53
    %62 = vmatprep.subr.mxu0 0.0
    %63 = vmatpush1.msra.mxu0 0.0
    %64 = vmatprep.subr.mxu0 0.0
    %65 = vmatpush1.msra.mxu0 0.0
    %66 = vmatprep.subr.mxu0 0.0
    %67 = vmatpush1.msra.mxu0 0.0
    %68 = vmatprep.subr.mxu0 0.0
    %69 = vmatpush1.msra.mxu0 0.0
    %70 = vmatprep.subr.mxu0 0.0
    %71 = vmatpush1.msra.mxu0 0.0
    %72 = vmatprep.subr.mxu0 0.0
    %73 = vmatpush1.msra.mxu0 0.0
    %74 = vmatprep.subr.mxu0 0.0
    %75 = vmatpush1.msra.mxu0 0.0
    %76 = vmatprep.subr.mxu0 0.0
    %77 = vmatpush1.msra.mxu0 0.0
    %78 = vmatprep.subr.mxu0 0.0
    %79 = vmatpush1.msra.mxu0 0.0
    %80 = vmatprep.subr.mxu0 0.0
    %81 = vmatpush1.msra.mxu0 0.0
    %82 = vmatprep.subr.mxu0 0.0
    %83 = vmatpush1.msra.mxu0 0.0
    %84 = vmatprep.subr.mxu0 0.0
    %85 = vmatpush1.msra.mxu0 0.0
    %86 = vmatprep.subr.mxu0 0.0
    %87 = vmatpush1.msra.mxu0 0.0
    %88 = vmatprep.subr.mxu0 0.0
    %89 = vmatpush1.msra.mxu0 0.0
    %90 = vmatprep.subr.mxu0 0.0
    %91 = vmatpush1.msra.mxu0 0.0
    %92 = vmatprep.subr.mxu0 0.0
    %93 = vmatpush1.msra.mxu0 0.0
    %94 = vmatprep.subr.mxu0 0.0
    %95 = vmatpush1.msra.mxu0 0.0
    %96 = vmatprep.subr.mxu0 0.0
    %97 = vmatpush1.msra.mxu0 0.0
    %98 = vmatprep.subr.mxu0 0.0
    %99 = vmatpush1.msra.mxu0 0.0
    %100 = vmatprep.subr.mxu0 0.0
    %101 = vmatpush1.msra.mxu0 0.0
    %102 = vmatprep.subr.mxu0 0.0
    %103 = vmatpush1.msra.mxu0 0.0
    %104 = vmatprep.subr.mxu0 0.0
    %105 = vmatpush1.msra.mxu0 0.0
    %106 = vmatprep.subr.mxu0 0.0
    %107 = vmatpush1.msra.mxu0 0.0
    %108 = vmatprep.subr.mxu0 0.0
    %109 = vmatpush1.msra.mxu0 0.0
    %110 = vmatprep.subr.mxu0 0.0
    %111 = vmatpush1.msra.mxu0 0.0
    %112 = vmatprep.subr.mxu0 0.0
    %113 = vmatpush1.msra.mxu0 0.0
    %114 = vmatprep.subr.mxu0 0.0
    %115 = vmatpush1.msra.mxu0 0.0
    %116 = vmatprep.subr.mxu0 0.0
    %117 = vmatpush1.msra.mxu0 0.0
    %118 = vmatprep.subr.mxu0 0.0
    %119 = vmatpush1.msra.mxu0 0.0
    %120 = vmatprep.subr.mxu0 0.0
    %121 = vmatpush1.msra.mxu0 0.0
    %122 = vmatprep.subr.mxu0 0.0
    %123 = vmatpush1.msra.mxu0 0.0
    %124 = vmatprep.mubr.f32.mxu0 0.0
    %125 = vmatmul.mubr.f32.gmra.mrb[0].mxu0 %v58
    %v126 = vpop.f32.mrb[0].mxu0
    %v127 = vadd.f32 0.0, %v126
    %v128 = vpop.f32.mrb[0].mxu0
    %v129 = vadd.f32 0.0, %v128
    %130 = vdwg.mxu0
    %131 = vmatprep.subr.mxu0 0.0
    %132 = vmatpush1.msra.mxu0 %v55
    %133 = vmatprep.subr.mxu0 0.0
    %134 = vmatpush1.msra.mxu0 0.0
    %135 = vmatprep.subr.mxu0 0.0
    %136 = vmatpush1.msra.mxu0 0.0
    %137 = vmatprep.subr.mxu0 0.0
    %138 = vmatpush1.msra.mxu0 0.0
    %139 = vmatprep.subr.mxu0 0.0
    %140 = vmatpush1.msra.mxu0 0.0
    %141 = vmatprep.subr.mxu0 0.0
    %142 = vmatpush1.msra.mxu0 0.0
    %143 = vmatprep.subr.mxu0 0.0
    %144 = vmatpush1.msra.mxu0 0.0
    %145 = vmatprep.subr.mxu0 0.0
    %146 = vmatpush1.msra.mxu0 0.0
    %147 = vmatprep.subr.mxu0 0.0
    %148 = vmatpush1.msra.mxu0 0.0
    %149 = vmatprep.subr.mxu0 0.0
    %150 = vmatpush1.msra.mxu0 0.0
    %151 = vmatprep.subr.mxu0 0.0
    %152 = vmatpush1.msra.mxu0 0.0
    %153 = vmatprep.subr.mxu0 0.0
    %154 = vmatpush1.msra.mxu0 0.0
    %155 = vmatprep.subr.mxu0 0.0
    %156 = vmatpush1.msra.mxu0 0.0
    %157 = vmatprep.subr.mxu0 0.0
    %158 = vmatpush1.msra.mxu0 0.0
    %159 = vmatprep.subr.mxu0 0.0
    %160 = vmatpush1.msra.mxu0 0.0
    %161 = vmatprep.subr.mxu0 0.0
    %162 = vmatpush1.msra.mxu0 0.0
    %163 = vmatprep.subr.mxu0 0.0
    %164 = vmatpush1.msra.mxu0 0.0
    %165 = vmatprep.subr.mxu0 0.0
    %166 = vmatpush1.msra.mxu0 0.0
    %167 = vmatprep.subr.mxu0 0.0
    %168 = vmatpush1.msra.mxu0 0.0
    %169 = vmatprep.subr.mxu0 0.0
    %170 = vmatpush1.msra.mxu0 0.0
    %171 = vmatprep.subr.mxu0 0.0
    %172 = vmatpush1.msra.mxu0 0.0
    %173 = vmatprep.subr.mxu0 0.0
    %174 = vmatpush1.msra.mxu0 0.0
    %175 = vmatprep.subr.mxu0 0.0
    %176 = vmatpush1.msra.mxu0 0.0
    %177 = vmatprep.subr.mxu0 0.0
    %178 = vmatpush1.msra.mxu0 0.0
    %179 = vmatprep.subr.mxu0 0.0
    %180 = vmatpush1.msra.mxu0 0.0
    %181 = vmatprep.subr.mxu0 0.0
    %182 = vmatpush1.msra.mxu0 0.0
    %183 = vmatprep.subr.mxu0 0.0
    %184 = vmatpush1.msra.mxu0 0.0
    %185 = vmatprep.subr.mxu0 0.0
    %186 = vmatpush1.msra.mxu0 0.0
    %187 = vmatprep.subr.mxu0 0.0
    %188 = vmatpush1.msra.mxu0 0.0
    %189 = vmatprep.subr.mxu0 0.0
    %190 = vmatpush1.msra.mxu0 0.0
    %191 = vmatprep.subr.mxu0 0.0
    %192 = vmatpush1.msra.mxu0 0.0
    %193 = vmatprep.subr.mxu0 0.0
    %194 = vmatpush1.msra.mxu0 0.0
    %195 = vmatprep.mubr.f32.mxu0 0.0
    %196 = vmatmul.mubr.f32.gmra.mrb[0].mxu0 %v58
    %v197 = vpop.f32.mrb[0].mxu0
    %v198 = vadd.f32 0.0, %v197
    %v199 = vpop.f32.mrb[0].mxu0
    %200 = vdwg.mxu0
    %s201 = sld [smem:[#allocation3]]
    %s202 = scvt.s32.f32 %s201
    %s203 = smul.f32 %s202, -0.23025851
    %v204 = vstv %s203
    %v205 = vmul.f32 %v204, 1.442695
    %v206 = vpow.pop %v205
    %s207 = vtos %v206
    %v208 = vmul.f32 %v127, %v127
    %v209 = vmul.f32 %v129, %v129
    %v210 = vmul.f32 %v198, %v198
    %vm211 = vcmask 1043456
    %v212 = vsel %vm211, %v208, 0.0
    %v213 = vsel %vm211, %v209, 0.0
    %v214 = vadd.f32 %v212, %v213
    %vm215 = vcmask 3072
    %v216 = vsel %vm215, %v210, 0.0
    %v217 = vadd.f32 %v214, %v216
    %218 = vadd.xlane.f32.xlu0 %v217
    %v219 = vpop.xlane.xlu0 %218
    %v220 = vrsqrt.pop %v219
    %v221 = vmul.f32 %v219, %v220
    %vm222 = vcmp.eq.f32.partialorder %v219, inf
    %v223 = vsel %vm222, %v219, %v221
    %vm224 = vcmp.eq.f32.partialorder %v219, 0.0
    %v225 = vand.u32 %v219, 2147483648
    %v226 = vsel %vm224, %v225, %v223
    %v227 = vld [vmem:[#allocation9] sm:$0xff]
    %v228 = vld [vmem:[#allocation9 + $0x8] sm:$0xf]
    %v229 = vstv %s207
    %v230 = vmul.f32 %v226, %v229
    %v233 = vunpack.c.l.s4 839922192
    %v234 = vunpack.c.0.s8 %v233
    %v235 = vlaneseq
    %v236 = vshrl.u32 %v235, 7
    %v237 = vsub.s32 %v234, %v236
    %v238 = vrot.slane %v230, %v237
    %v240 = vmul.f32 %v227, %v238
    %v241 = vmul.f32 %v228, %v238
    %v243 = vcombine.high %v240, %v240
    %v245 = vadd.f32 %v127, %v240
    %v246 = vadd.f32 %v129, %v243
    %v247 = vadd.f32 %v198, %v241
    %v251 = vrot.slane %v245, 4
    %v252 = vrot.slane %v246, 4
    %v253 = vrot.slane %v247, 4
    %v257 = vsel %vm211, %v127, %v251
    %v258 = vsel %vm211, %v129, %v252
    %v259 = vsel %vm211, %v198, %v253
    %260 = vst [vmem:[#allocation10] sm:$0xff] %v257
    %261 = vst [vmem:[#allocation10 + $0x8] sm:$0xff] %v258
    %vm262 = vcmask 7168
    %263 = vst.msk [vmem:[#allocation10 + $0x10] sm:$0xff] %vm262, %v259
    // Predicated region
    $region26: #{tpu_custom_call.1} parent=1 // pred_check
      _
    $region27: #{tpu_custom_call.1} parent=1 // pred_check_branch
      %265 = sbr.rel (0) target = $region29
    $region28: #{tpu_custom_call.1} parent=1 // pred_region
      %s267 = ssub.s32 384, 384
      %268 = vsyncadd [#allocation6], %s267
      %s270 = sshll.u32 [#allocation10], 4
      %s271 = int_to_ptr.vmem [resolvable:$true] %s270
      %273 = dma.vmem_to_hbm [thread:$0]  %s271, 384, %s4, [#allocation6]
    $region29: #{tpu_custom_call.1} parent=1 // pred_fallthru
      _
    // Predicated region
    $region30: #{tpu_custom_call.1} parent=1 // pred_check
      _
    $region31: #{tpu_custom_call.1} parent=1 // pred_check_branch
      %275 = sbr.rel (0) target = $region33
    $region32: #{tpu_custom_call.1} parent=1 // pred_region
      %276 = dma.done [#allocation6], 384
    $region33: #{tpu_custom_call.1} parent=1 // pred_fallthru
      _
    %277 = vsyncpa [#allocation5], 1
    %278 = vsyncpa [#allocation8], 1
    %279 = vsyncpa [#allocation6], 1

</llo_original>
